<compile_context>
chip_gen: v5e
topology: v5e:2x2
jax: 0.10.0
libtpu: 0.0.40
codegen_flags: <defaults>
</compile_context>

<pallas_src>
import math

import jax
import jax.numpy as jnp
from jax.experimental import pallas as pl
from jax.experimental.pallas import tpu as pltpu

EPS = 1e-5
_LANES = 128


def _sublane_multiple(dtype) -> int:
    # Packed sublane multiple: 8 for 4-byte, 16 for 2-byte, 32 for 1-byte.
    itemsize = jnp.dtype(dtype).itemsize
    return max(8, 32 // itemsize)


def _vmem_limit_bytes() -> int:
    """Generation-aware scoped-VMEM limit.

    ~3/4 of physical VMEM, capped at 96 MiB: v5e/v6e (128 MiB physical) ->
    96 MiB; v7x (64 MiB per TensorCore) -> 48 MiB.  Falls back to the
    conservative v7x value if the hardware query is unavailable.
    """
    cap = None
    try:
        cap = getattr(pltpu.get_tpu_info(), "vmem_capacity_bytes", None)
    except Exception:
        cap = None
    if not cap:
        cap = 64 * 1024 * 1024
    return int(min(cap * 3 // 4, 96 * 1024 * 1024))


def _choose_block_rows(rows, row_width, dtype, vmem_limit, f32_temps):
    """Largest sublane-aligned row tile that fits the VMEM budget."""
    sub = _sublane_multiple(dtype)
    itemsize = jnp.dtype(dtype).itemsize
    # Per-row working set: in + out tiles (each double-buffered) in the
    # caller's dtype, plus `f32_temps` full-width f32 intermediates.
    ws_per_row = max(row_width * (4 * itemsize + 4 * f32_temps), 1)
    budget = int(vmem_limit * 0.85)            # headroom for internal scratch
    max_rows_vmem = max(budget // ws_per_row, sub)
    # ~8 MiB per x buffer keeps a streaming kernel at 85%+ of HBM roofline.
    target_rows = max((8 * 1024 * 1024) // max(row_width * itemsize, 1), sub)
    block_rows = int(min(max_rows_vmem, target_rows, 4096))
    block_rows = max(sub, (block_rows // sub) * sub)
    if block_rows >= rows:
        if rows >= 2 * sub:
            # Keep >= 2 grid steps so the "parallel" axis can shard across
            # v7x's two TensorCores (no cost on single-TC v5e/v6e).
            block_rows = max(sub, ((rows // 2) // sub) * sub)
        else:
            block_rows = rows                  # single full-extent tile
    return block_rows


def _layernorm_kernel(x_ref, gamma_ref, beta_ref, o_ref):
    # x_ref: (block_rows, hidden) tile in VMEM; math in f32.
    x = x_ref[...].astype(jnp.float32)
    mean = jnp.mean(x, axis=-1, keepdims=True)
    centered = x - mean
    var = jnp.mean(centered * centered, axis=-1, keepdims=True)
    inv = jax.lax.rsqrt(var + EPS)
    gamma = gamma_ref[...].astype(jnp.float32)   # (1, hidden), VMEM-resident
    beta = beta_ref[...].astype(jnp.float32)
    # Padded rows of a ragged last tile may hold garbage, but the reduction is
    # per-row and Pallas masks the writeback to valid rows, so this is safe.
    o_ref[...] = (centered * inv * gamma + beta).astype(o_ref.dtype)


def _make_folded_kernel(num_folds: int, hidden: int):
    """Small-hidden kernel: G = num_folds original rows live side by side in
    the 128-wide lane axis; statistics are per-segment masked reductions."""
    inv_h = 1.0 / float(hidden)

    def kernel(x_ref, gamma_ref, beta_ref, o_ref):
        x = x_ref[...].astype(jnp.float32)                    # (B, G*hidden)
        lane = jax.lax.broadcasted_iota(jnp.int32, x.shape, 1)
        masks = []
        mean_b = jnp.zeros_like(x)
        for g in range(num_folds):
            m = (lane >= g * hidden) & (lane < (g + 1) * hidden)
            masks.append(m)
            s = jnp.sum(jnp.where(m, x, 0.0), axis=-1, keepdims=True) * inv_h
            mean_b = jnp.where(m, s, mean_b)
        centered = x - mean_b
        c2 = centered * centered
        var_b = jnp.zeros_like(x)
        for g in range(num_folds):
            m = masks[g]
            v = jnp.sum(jnp.where(m, c2, 0.0), axis=-1, keepdims=True) * inv_h
            var_b = jnp.where(m, v, var_b)
        inv = jax.lax.rsqrt(var_b + EPS)
        gamma = gamma_ref[...].astype(jnp.float32)             # (1, G*hidden)
        beta = beta_ref[...].astype(jnp.float32)
        o_ref[...] = (centered * inv * gamma + beta).astype(o_ref.dtype)

    return kernel


def layernorm(x, gamma, beta, *, block_rows=None):
    """x: (..., hidden). Normalizes over the last dim; affine gamma/beta."""
    orig_shape = x.shape
    hidden = orig_shape[-1]
    rows = int(math.prod(orig_shape[:-1]))
    dtype = x.dtype
    itemsize = jnp.dtype(dtype).itemsize
    vmem_limit = _vmem_limit_bytes()

    # Lane-density fold: for hidden < 128 that divides 128, pack G rows into
    # the 128-wide lane axis so all loads/stores are unmasked full-lane ops.
    G = _LANES // hidden if (hidden < _LANES and _LANES % hidden == 0) else 1
    fold = G > 1 and rows > 0 and rows % G == 0

    if fold:
        width = G * hidden                       # == 128
        rows2 = rows // G
        x2 = x.reshape(rows2, width)
        g2 = jnp.tile(gamma.reshape(1, hidden), (1, G))
        b2 = jnp.tile(beta.reshape(1, hidden), (1, G))
        kernel = _make_folded_kernel(G, hidden)
        f32_temps = 6                            # x, mean_b, centered, c2, ...
    else:
        width = hidden
        rows2 = rows
        x2 = x.reshape(rows2, width)
        g2 = gamma.reshape(1, hidden)
        b2 = beta.reshape(1, hidden)
        kernel = _layernorm_kernel
        f32_temps = 3                            # x, centered, squared

    if block_rows is None:
        block_rows = _choose_block_rows(rows2, width, dtype, vmem_limit,
                                        f32_temps)
    grid = (pl.cdiv(rows2, block_rows),)

    cost = pl.CostEstimate(
        flops=10 * rows * hidden,
        transcendentals=rows,
        bytes_accessed=(2 * rows * hidden + 2 * hidden) * itemsize,
    )

    out = pl.pallas_call(
        kernel,
        out_shape=jax.ShapeDtypeStruct((rows2, width), dtype),
        grid_spec=pltpu.PrefetchScalarGridSpec(
            num_scalar_prefetch=0,
            grid=grid,
            in_specs=[
                pl.BlockSpec((block_rows, width), lambda i: (i, 0)),
                pl.BlockSpec((1, width), lambda i: (0, 0)),
                pl.BlockSpec((1, width), lambda i: (0, 0)),
            ],
            out_specs=pl.BlockSpec((block_rows, width), lambda i: (i, 0)),
        ),
        compiler_params=pltpu.CompilerParams(
            dimension_semantics=("parallel",),
            vmem_limit_bytes=int(vmem_limit),
        ),
        cost_estimate=cost,
    )(x2, g2, b2)
    return out.reshape(orig_shape)


if __name__ == "__main__":
    key = jax.random.PRNGKey(0)
    k1, k2, k3, k4 = jax.random.split(key, 4)

    # 1) Module's small-hidden shape (hidden=32) -> exercises the lane-fold
    #    path; non-trivial gamma/beta so the folded affine tiling is checked.
    batch, seq, hidden = 2, 8, 32
    x = jax.random.normal(k1, (batch, seq, hidden), dtype=jnp.float32)
    gamma = 1.0 + 0.1 * jax.random.normal(k2, (hidden,), dtype=jnp.float32)
    beta = 0.1 * jax.random.normal(k3, (hidden,), dtype=jnp.float32)
    y = layernorm(x, gamma, beta)
    jax.block_until_ready(y)

    mean = jnp.mean(x, axis=-1, keepdims=True)
    var = jnp.mean((x - mean) ** 2, axis=-1, keepdims=True)
    ref = (x - mean) / jnp.sqrt(var + EPS) * gamma + beta
    assert jnp.allclose(y, ref, atol=1e-5, rtol=1e-5), "fold-path mismatch"

    # 2) Lane-dense hidden (multiple of 128) -> exercises the plain tiled path
    #    and the >=2-step grid clamp.
    hidden2 = 256
    x2 = jax.random.normal(k4, (4, 16, hidden2), dtype=jnp.float32)
    gamma2 = jnp.ones((hidden2,), dtype=jnp.float32)
    beta2 = jnp.zeros((hidden2,), dtype=jnp.float32)
    y2 = layernorm(x2, gamma2, beta2)
    jax.block_until_ready(y2)

    mean2 = jnp.mean(x2, axis=-1, keepdims=True)
    var2 = jnp.mean((x2 - mean2) ** 2, axis=-1, keepdims=True)
    ref2 = (x2 - mean2) / jnp.sqrt(var2 + EPS) * gamma2 + beta2
    assert jnp.allclose(y2, ref2, atol=1e-5, rtol=1e-5), "plain-path mismatch"

    print("KERNEL_OK")
</pallas_src>

<mosaic_0001>
module attributes {stable_mosaic.version = 11 : i64} {
  func.func @kernel(%arg0: i32, %arg1: memref<4x128xf32, #tpu.memory_space<vmem>>, %arg2: memref<1x128xf32, #tpu.memory_space<vmem>>, %arg3: memref<1x128xf32, #tpu.memory_space<vmem>>, %arg4: memref<4x128xf32, #tpu.memory_space<vmem>>) attributes {dimension_semantics = [#tpu.dimension_semantics<parallel>], iteration_bounds = array<i64: 1>, scalar_prefetch = 0 : i64, scratch_operands = 0 : i64, tpu.core_type = #tpu.core_type<tc>, window_params = [{transform_indices = @transform_0, window_bounds = array<i64: 4, 128>}, {pipeline_mode = #tpu.pipeline_mode<synchronous>, transform_indices = @transform_1, window_bounds = array<i64: 1, 128>}, {pipeline_mode = #tpu.pipeline_mode<synchronous>, transform_indices = @transform_2, window_bounds = array<i64: 1, 128>}, {transform_indices = @transform_3, window_bounds = array<i64: 4, 128>}]} {
    %c0 = arith.constant 0 : index
    %c0_0 = arith.constant 0 : index
    %0 = vector.load %arg1[%c0, %c0_0] : memref<4x128xf32, #tpu.memory_space<vmem>>, vector<4x128xf32>
    %1 = tpu.iota {dimensions = array<i32: 1>} : vector<4x128xi32>
    %cst = arith.constant 0.000000e+00 : f32
    %2 = vector.broadcast %cst : f32 to vector<4x128xf32>
    %c0_i32 = arith.constant 0 : i32
    %3 = vector.broadcast %c0_i32 : i32 to vector<4x128xi32>
    %4 = arith.cmpi sge, %1, %3 : vector<4x128xi32>
    %c32_i32 = arith.constant 32 : i32
    %5 = vector.broadcast %c32_i32 : i32 to vector<4x128xi32>
    %6 = arith.cmpi slt, %1, %5 : vector<4x128xi32>
    %7 = arith.andi %4, %6 : vector<4x128xi1>
    %cst_1 = arith.constant 0.000000e+00 : f32
    %8 = vector.broadcast %cst_1 : f32 to vector<4x128xf32>
    %9 = arith.select %7, %0, %8 : vector<4x128xi1>, vector<4x128xf32>
    %cst_2 = arith.constant dense<0.000000e+00> : vector<4xf32>
    %10 = vector.multi_reduction <add>, %9, %cst_2 [1] : vector<4x128xf32> to vector<4xf32>
    %11 = vector.shape_cast %10 : vector<4xf32> to vector<4x1xf32>
    %cst_3 = arith.constant 3.125000e-02 : f32
    %12 = vector.broadcast %cst_3 : f32 to vector<4x1xf32>
    %13 = arith.mulf %11, %12 : vector<4x1xf32>
    %14 = vector.shape_cast %13 : vector<4x1xf32> to vector<4x1xf32>
    %15 = vector.broadcast %14 : vector<4x1xf32> to vector<4x128xf32>
    %16 = arith.select %7, %15, %2 : vector<4x128xi1>, vector<4x128xf32>
    %c32_i32_4 = arith.constant 32 : i32
    %17 = vector.broadcast %c32_i32_4 : i32 to vector<4x128xi32>
    %18 = arith.cmpi sge, %1, %17 : vector<4x128xi32>
    %c64_i32 = arith.constant 64 : i32
    %19 = vector.broadcast %c64_i32 : i32 to vector<4x128xi32>
    %20 = arith.cmpi slt, %1, %19 : vector<4x128xi32>
    %21 = arith.andi %18, %20 : vector<4x128xi1>
    %cst_5 = arith.constant 0.000000e+00 : f32
    %22 = vector.broadcast %cst_5 : f32 to vector<4x128xf32>
    %23 = arith.select %21, %0, %22 : vector<4x128xi1>, vector<4x128xf32>
    %cst_6 = arith.constant dense<0.000000e+00> : vector<4xf32>
    %24 = vector.multi_reduction <add>, %23, %cst_6 [1] : vector<4x128xf32> to vector<4xf32>
    %25 = vector.shape_cast %24 : vector<4xf32> to vector<4x1xf32>
    %cst_7 = arith.constant 3.125000e-02 : f32
    %26 = vector.broadcast %cst_7 : f32 to vector<4x1xf32>
    %27 = arith.mulf %25, %26 : vector<4x1xf32>
    %28 = vector.shape_cast %27 : vector<4x1xf32> to vector<4x1xf32>
    %29 = vector.broadcast %28 : vector<4x1xf32> to vector<4x128xf32>
    %30 = arith.select %21, %29, %16 : vector<4x128xi1>, vector<4x128xf32>
    %c64_i32_8 = arith.constant 64 : i32
    %31 = vector.broadcast %c64_i32_8 : i32 to vector<4x128xi32>
    %32 = arith.cmpi sge, %1, %31 : vector<4x128xi32>
    %c96_i32 = arith.constant 96 : i32
    %33 = vector.broadcast %c96_i32 : i32 to vector<4x128xi32>
    %34 = arith.cmpi slt, %1, %33 : vector<4x128xi32>
    %35 = arith.andi %32, %34 : vector<4x128xi1>
    %cst_9 = arith.constant 0.000000e+00 : f32
    %36 = vector.broadcast %cst_9 : f32 to vector<4x128xf32>
    %37 = arith.select %35, %0, %36 : vector<4x128xi1>, vector<4x128xf32>
    %cst_10 = arith.constant dense<0.000000e+00> : vector<4xf32>
    %38 = vector.multi_reduction <add>, %37, %cst_10 [1] : vector<4x128xf32> to vector<4xf32>
    %39 = vector.shape_cast %38 : vector<4xf32> to vector<4x1xf32>
    %cst_11 = arith.constant 3.125000e-02 : f32
    %40 = vector.broadcast %cst_11 : f32 to vector<4x1xf32>
    %41 = arith.mulf %39, %40 : vector<4x1xf32>
    %42 = vector.shape_cast %41 : vector<4x1xf32> to vector<4x1xf32>
    %43 = vector.broadcast %42 : vector<4x1xf32> to vector<4x128xf32>
    %44 = arith.select %35, %43, %30 : vector<4x128xi1>, vector<4x128xf32>
    %c96_i32_12 = arith.constant 96 : i32
    %45 = vector.broadcast %c96_i32_12 : i32 to vector<4x128xi32>
    %46 = arith.cmpi sge, %1, %45 : vector<4x128xi32>
    %c128_i32 = arith.constant 128 : i32
    %47 = vector.broadcast %c128_i32 : i32 to vector<4x128xi32>
    %48 = arith.cmpi slt, %1, %47 : vector<4x128xi32>
    %49 = arith.andi %46, %48 : vector<4x128xi1>
    %cst_13 = arith.constant 0.000000e+00 : f32
    %50 = vector.broadcast %cst_13 : f32 to vector<4x128xf32>
    %51 = arith.select %49, %0, %50 : vector<4x128xi1>, vector<4x128xf32>
    %cst_14 = arith.constant dense<0.000000e+00> : vector<4xf32>
    %52 = vector.multi_reduction <add>, %51, %cst_14 [1] : vector<4x128xf32> to vector<4xf32>
    %53 = vector.shape_cast %52 : vector<4xf32> to vector<4x1xf32>
    %cst_15 = arith.constant 3.125000e-02 : f32
    %54 = vector.broadcast %cst_15 : f32 to vector<4x1xf32>
    %55 = arith.mulf %53, %54 : vector<4x1xf32>
    %56 = vector.shape_cast %55 : vector<4x1xf32> to vector<4x1xf32>
    %57 = vector.broadcast %56 : vector<4x1xf32> to vector<4x128xf32>
    %58 = arith.select %49, %57, %44 : vector<4x128xi1>, vector<4x128xf32>
    %59 = arith.subf %0, %58 : vector<4x128xf32>
    %60 = arith.mulf %59, %59 : vector<4x128xf32>
    %cst_16 = arith.constant 0.000000e+00 : f32
    %61 = vector.broadcast %cst_16 : f32 to vector<4x128xf32>
    %cst_17 = arith.constant 0.000000e+00 : f32
    %62 = vector.broadcast %cst_17 : f32 to vector<4x128xf32>
    %63 = arith.select %7, %60, %62 : vector<4x128xi1>, vector<4x128xf32>
    %cst_18 = arith.constant dense<0.000000e+00> : vector<4xf32>
    %64 = vector.multi_reduction <add>, %63, %cst_18 [1] : vector<4x128xf32> to vector<4xf32>
    %65 = vector.shape_cast %64 : vector<4xf32> to vector<4x1xf32>
    %cst_19 = arith.constant 3.125000e-02 : f32
    %66 = vector.broadcast %cst_19 : f32 to vector<4x1xf32>
    %67 = arith.mulf %65, %66 : vector<4x1xf32>
    %68 = vector.shape_cast %67 : vector<4x1xf32> to vector<4x1xf32>
    %69 = vector.broadcast %68 : vector<4x1xf32> to vector<4x128xf32>
    %70 = arith.select %7, %69, %61 : vector<4x128xi1>, vector<4x128xf32>
    %cst_20 = arith.constant 0.000000e+00 : f32
    %71 = vector.broadcast %cst_20 : f32 to vector<4x128xf32>
    %72 = arith.select %21, %60, %71 : vector<4x128xi1>, vector<4x128xf32>
    %cst_21 = arith.constant dense<0.000000e+00> : vector<4xf32>
    %73 = vector.multi_reduction <add>, %72, %cst_21 [1] : vector<4x128xf32> to vector<4xf32>
    %74 = vector.shape_cast %73 : vector<4xf32> to vector<4x1xf32>
    %cst_22 = arith.constant 3.125000e-02 : f32
    %75 = vector.broadcast %cst_22 : f32 to vector<4x1xf32>
    %76 = arith.mulf %74, %75 : vector<4x1xf32>
    %77 = vector.shape_cast %76 : vector<4x1xf32> to vector<4x1xf32>
    %78 = vector.broadcast %77 : vector<4x1xf32> to vector<4x128xf32>
    %79 = arith.select %21, %78, %70 : vector<4x128xi1>, vector<4x128xf32>
    %cst_23 = arith.constant 0.000000e+00 : f32
    %80 = vector.broadcast %cst_23 : f32 to vector<4x128xf32>
    %81 = arith.select %35, %60, %80 : vector<4x128xi1>, vector<4x128xf32>
    %cst_24 = arith.constant dense<0.000000e+00> : vector<4xf32>
    %82 = vector.multi_reduction <add>, %81, %cst_24 [1] : vector<4x128xf32> to vector<4xf32>
    %83 = vector.shape_cast %82 : vector<4xf32> to vector<4x1xf32>
    %cst_25 = arith.constant 3.125000e-02 : f32
    %84 = vector.broadcast %cst_25 : f32 to vector<4x1xf32>
    %85 = arith.mulf %83, %84 : vector<4x1xf32>
    %86 = vector.shape_cast %85 : vector<4x1xf32> to vector<4x1xf32>
    %87 = vector.broadcast %86 : vector<4x1xf32> to vector<4x128xf32>
    %88 = arith.select %35, %87, %79 : vector<4x128xi1>, vector<4x128xf32>
    %cst_26 = arith.constant 0.000000e+00 : f32
    %89 = vector.broadcast %cst_26 : f32 to vector<4x128xf32>
    %90 = arith.select %49, %60, %89 : vector<4x128xi1>, vector<4x128xf32>
    %cst_27 = arith.constant dense<0.000000e+00> : vector<4xf32>
    %91 = vector.multi_reduction <add>, %90, %cst_27 [1] : vector<4x128xf32> to vector<4xf32>
    %92 = vector.shape_cast %91 : vector<4xf32> to vector<4x1xf32>
    %cst_28 = arith.constant 3.125000e-02 : f32
    %93 = vector.broadcast %cst_28 : f32 to vector<4x1xf32>
    %94 = arith.mulf %92, %93 : vector<4x1xf32>
    %95 = vector.shape_cast %94 : vector<4x1xf32> to vector<4x1xf32>
    %96 = vector.broadcast %95 : vector<4x1xf32> to vector<4x128xf32>
    %97 = arith.select %49, %96, %88 : vector<4x128xi1>, vector<4x128xf32>
    %cst_29 = arith.constant 9.99999974E-6 : f32
    %98 = vector.broadcast %cst_29 : f32 to vector<4x128xf32>
    %99 = arith.addf %97, %98 : vector<4x128xf32>
    %100 = math.rsqrt %99 : vector<4x128xf32>
    %c0_30 = arith.constant 0 : index
    %c0_31 = arith.constant 0 : index
    %101 = vector.load %arg2[%c0_30, %c0_31] : memref<1x128xf32, #tpu.memory_space<vmem>>, vector<1x128xf32>
    %c0_32 = arith.constant 0 : index
    %c0_33 = arith.constant 0 : index
    %102 = vector.load %arg3[%c0_32, %c0_33] : memref<1x128xf32, #tpu.memory_space<vmem>>, vector<1x128xf32>
    %103 = arith.mulf %59, %100 : vector<4x128xf32>
    %104 = vector.broadcast %101 : vector<1x128xf32> to vector<4x128xf32>
    %105 = arith.mulf %103, %104 : vector<4x128xf32>
    %106 = vector.broadcast %102 : vector<1x128xf32> to vector<4x128xf32>
    %107 = arith.addf %105, %106 : vector<4x128xf32>
    %c0_34 = arith.constant 0 : index
    %c0_35 = arith.constant 0 : index
    %108 = vector.load %arg4[%c0_34, %c0_35] : memref<4x128xf32, #tpu.memory_space<vmem>>, vector<4x128xf32>
    tpu.vector_store %arg4[%c0_34, %c0_35], %107 {strides = array<i32>} : memref<4x128xf32, #tpu.memory_space<vmem>>, vector<4x128xf32>,
    return
  }
  func.func @transform_0(%arg0: i32) -> (i32, i32) {
    %c0_i32 = arith.constant 0 : i32
    %c0_i32_0 = arith.constant 0 : i32
    return %arg0, %c0_i32 : i32, i32
  }
  func.func @transform_1(%arg0: i32) -> (i32, i32) {
    %c0_i32 = arith.constant 0 : i32
    %c0_i32_0 = arith.constant 0 : i32
    %c0_i32_1 = arith.constant 0 : i32
    return %c0_i32, %c0_i32_0 : i32, i32
  }
  func.func @transform_2(%arg0: i32) -> (i32, i32) {
    %c0_i32 = arith.constant 0 : i32
    %c0_i32_0 = arith.constant 0 : i32
    %c0_i32_1 = arith.constant 0 : i32
    return %c0_i32, %c0_i32_0 : i32, i32
  }
  func.func @transform_3(%arg0: i32) -> (i32, i32) {
    %c0_i32 = arith.constant 0 : i32
    %c0_i32_0 = arith.constant 0 : i32
    return %arg0, %c0_i32 : i32, i32
  }
}

</mosaic_0001>

<llo_original>
// kernel: tpu_custom_call.1
$region0: #{tpu_custom_call.1}
  #allocation0 [shape = 'u32[]', space=smem, size = 0x4, offset = 0x4, fixed_abs, tag = 'smem constant byte address 0x4 - core index']
  #allocation1 [shape = 'u32[72,128]{1,0:T(1,128)}', space=vmem, size = 0x9000, scoped, tag = 'internal scratch']
  %s0 = inlined_call_operand.hbm [shape: f32[4,128], index: 0, kind: input, shape index: {}]
  %s1 = inlined_call_operand.hbm [shape: f32[1,128], index: 1, kind: input, shape index: {}]
  %s2 = inlined_call_operand.vmem [shape: f32[1,128], index: 2, kind: input, shape index: {}]
  %s3 = inlined_call_operand.hbm [shape: f32[4,128], index: 3, kind: output, shape index: {}]
  %s4 = sld [smem:[#allocation0]]
  $region30: #{tpu_custom_call.1} parent=0
    _
  %s6 = ssub.s32 1, %s4
  %s7 = scalar_select 0, %s6, %s4
  $region1: #{tpu_custom_call.1} parent=0
    #allocation2 [shape = 'u8[2048]{0}', space=vmem, size = 0x800, scoped, tag = 'input window, operand 0, single buffered']
    #allocation3 [shape = 's32[1]{0}', space=sflag, size = 0x4, scoped, tag = 'scoped memory for tpu_custom_call.1']
    #allocation4 [shape = 's32[1]{0}', space=sflag, size = 0x4, scoped, tag = 'scoped memory for tpu_custom_call.1']
    #allocation5 [shape = 'u8[512]{0}', space=vmem, size = 0x400, scoped, tag = 'input window, operand 1, single buffered']
    #allocation6 [shape = 's32[1]{0}', space=sflag, size = 0x4, scoped, tag = 'scoped memory for tpu_custom_call.1']
    #allocation7 [shape = 'u8[2048]{0}', space=vmem, size = 0x800, scoped, tag = 'output window, operand 0, single buffered']
    %8 = vsyncpa [#allocation3], 0
    %9 = vsyncpa [#allocation6], 0
    %10 = vsyncpa [#allocation4], 0
    // Predicated region
    $region2: #{tpu_custom_call.1} parent=1 // pred_check
      _
    $region3: #{tpu_custom_call.1} parent=1 // pred_check_branch
      %12 = sbr.rel (0) target = $region5
    $region4: #{tpu_custom_call.1} parent=1 // pred_region
      %14 = vsyncadd [#allocation3], 0
      %s16 = sshll.u32 %s0, 4
      %s17 = int_to_ptr.hbm [resolvable:$true] %s16
      %s18 = sshll.u32 [#allocation2], 4
      %s19 = int_to_ptr.vmem [resolvable:$true] %s18
      %21 = dma.hbm_to_vmem [thread:$0]  %s17, 64, %s19, [#allocation3]
    $region5: #{tpu_custom_call.1} parent=1 // pred_fallthru
      _
    // Predicated region
    $region6: #{tpu_custom_call.1} parent=1 // pred_check
      _
    $region7: #{tpu_custom_call.1} parent=1 // pred_check_branch
      %23 = sbr.rel (0) target = $region9
    $region8: #{tpu_custom_call.1} parent=1 // pred_region
      %25 = vsyncadd [#allocation6], 0
      %s27 = sshll.u32 %s1, 4
      %s28 = int_to_ptr.hbm [resolvable:$true] %s27
      %s29 = sshll.u32 [#allocation5], 4
      %s30 = int_to_ptr.vmem [resolvable:$true] %s29
      %32 = dma.hbm_to_vmem [thread:$0]  %s28, 16, %s30, [#allocation6]
    $region9: #{tpu_custom_call.1} parent=1 // pred_fallthru
      _
    // Predicated region
    $region10: #{tpu_custom_call.1} parent=1 // pred_check
      _
    $region11: #{tpu_custom_call.1} parent=1 // pred_check_branch
      %34 = sbr.rel (0) target = $region13
    $region12: #{tpu_custom_call.1} parent=1 // pred_region
      _
    $region13: #{tpu_custom_call.1} parent=1 // pred_fallthru
      _
    // Predicated region
    $region14: #{tpu_custom_call.1} parent=1 // pred_check
      _
    $region15: #{tpu_custom_call.1} parent=1 // pred_check_branch
      %36 = sbr.rel (0) target = $region17
    $region16: #{tpu_custom_call.1} parent=1 // pred_region
      %38 = dma.done [#allocation3], 64
    $region17: #{tpu_custom_call.1} parent=1 // pred_fallthru
      _
    // Predicated region
    $region18: #{tpu_custom_call.1} parent=1 // pred_check
      _
    $region19: #{tpu_custom_call.1} parent=1 // pred_check_branch
      %40 = sbr.rel (0) target = $region21
    $region20: #{tpu_custom_call.1} parent=1 // pred_region
      %42 = dma.done [#allocation6], 16
    $region21: #{tpu_custom_call.1} parent=1 // pred_fallthru
      _
    %v43 = vld [vmem:[#allocation2] sm:$0xf]
    %v44 = vlaneseq
    %v45 = vand.u32 %v44, 127
    %vm46 = vcmp.ge.s32.totalorder %v45, 0
    %vm47 = vcmp.lt.s32.totalorder %v45, 32
    %vm48 = vmand %vm46, %vm47
    %v49 = vsel %vm48, %v43, 0.0
    %vm50 = vcmask 1043456
    %v51 = vsel %vm50, %v49, 0.0
    %52 = vadd.xlane.f32.xlu0 %v51
    %v53 = vpop.xlane.xlu0 %52
    %v54 = vmul.f32 %v53, 0.03125
    %v55 = vsel %vm48, %v54, 0.0
    %vm56 = vcmp.ge.s32.totalorder %v45, 32
    %vm57 = vcmp.lt.s32.totalorder %v45, 64
    %vm58 = vmand %vm56, %vm57
    %v59 = vsel %vm58, %v43, 0.0
    %v60 = vsel %vm50, %v59, 0.0
    %61 = vadd.xlane.f32.xlu0 %v60
    %v62 = vpop.xlane.xlu0 %61
    %v63 = vmul.f32 %v62, 0.03125
    %v64 = vsel %vm58, %v63, %v55
    %vm65 = vcmp.ge.s32.totalorder %v45, 64
    %vm66 = vcmp.lt.s32.totalorder %v45, 96
    %vm67 = vmand %vm65, %vm66
    %v68 = vsel %vm67, %v43, 0.0
    %v69 = vsel %vm50, %v68, 0.0
    %70 = vadd.xlane.f32.xlu0 %v69
    %v71 = vpop.xlane.xlu0 %70
    %v72 = vmul.f32 %v71, 0.03125
    %v73 = vsel %vm67, %v72, %v64
    %vm74 = vcmp.ge.s32.totalorder %v45, 96
    %vm75 = vcmp.lt.s32.totalorder %v45, 128
    %vm76 = vmand %vm74, %vm75
    %v77 = vsel %vm76, %v43, 0.0
    %v78 = vsel %vm50, %v77, 0.0
    %79 = vadd.xlane.f32.xlu0 %v78
    %v80 = vpop.xlane.xlu0 %79
    %v81 = vmul.f32 %v80, 0.03125
    %v82 = vsel %vm76, %v81, %v73
    %v83 = vsub.f32 %v43, %v82
    %v84 = vmul.f32 %v83, %v83
    %v85 = vsel %vm48, %v84, 0.0
    %v86 = vsel %vm50, %v85, 0.0
    %87 = vadd.xlane.f32.xlu0 %v86
    %v88 = vpop.xlane.xlu0 %87
    %v89 = vmul.f32 %v88, 0.03125
    %v90 = vsel %vm48, %v89, 0.0
    %v91 = vsel %vm58, %v84, 0.0
    %v92 = vsel %vm50, %v91, 0.0
    %93 = vadd.xlane.f32.xlu0 %v92
    %v94 = vpop.xlane.xlu0 %93
    %v95 = vmul.f32 %v94, 0.03125
    %v96 = vsel %vm58, %v95, %v90
    %v97 = vsel %vm67, %v84, 0.0
    %v98 = vsel %vm50, %v97, 0.0
    %99 = vadd.xlane.f32.xlu0 %v98
    %v100 = vpop.xlane.xlu0 %99
    %v101 = vmul.f32 %v100, 0.03125
    %v102 = vsel %vm67, %v101, %v96
    %v103 = vsel %vm76, %v84, 0.0
    %v104 = vsel %vm50, %v103, 0.0
    %105 = vadd.xlane.f32.xlu0 %v104
    %v106 = vpop.xlane.xlu0 %105
    %v107 = vmul.f32 %v106, 0.03125
    %v108 = vsel %vm76, %v107, %v102
    %v109 = vadd.f32 %v108, 1e-05
    %v110 = vrsqrt.pop %v109
    %v111 = vmul.f32 %v110, %v109
    %v112 = vmul.f32 %v111, %v110
    %v113 = vmul.f32 0.5, %v112
    %v114 = vsub.f32 1.5, %v113
    %v115 = vmul.f32 %v110, %v114
    %vm116 = vweird.f32 %v109
    %vm117 = vweird.f32 %v110
    %vm118 = vmor %vm116, %vm117
    %v119 = vsel %vm118, %v110, %v115
    %v120 = vld [vmem:[#allocation5] sm:$0x1]
    %v121 = vld [vmem:[%s2] sm:$0x1]
    %v122 = vmul.f32 %v83, %v119
    %v124 = vperm.slane %v120, 0
    %v126 = vmul.f32 %v122, %v124
    %v128 = vperm.slane %v121, 0
    %v130 = vadd.f32 %v126, %v128
    %131 = vst [vmem:[#allocation7] sm:$0xf] %v130
    // Predicated region
    $region22: #{tpu_custom_call.1} parent=1 // pred_check
      _
    $region23: #{tpu_custom_call.1} parent=1 // pred_check_branch
      %133 = sbr.rel (0) target = $region25
    $region24: #{tpu_custom_call.1} parent=1 // pred_region
      %135 = vsyncadd [#allocation4], 0
      %s137 = sshll.u32 [#allocation7], 4
      %s138 = int_to_ptr.vmem [resolvable:$true] %s137
      %s139 = sshll.u32 %s3, 4
      %s140 = int_to_ptr.hbm [resolvable:$true] %s139
      %142 = dma.vmem_to_hbm [thread:$0]  %s138, 64, %s140, [#allocation4]
    $region25: #{tpu_custom_call.1} parent=1 // pred_fallthru
      _
    // Predicated region
    $region26: #{tpu_custom_call.1} parent=1 // pred_check
      _
    $region27: #{tpu_custom_call.1} parent=1 // pred_check_branch
      %144 = sbr.rel (0) target = $region29
    $region28: #{tpu_custom_call.1} parent=1 // pred_region
      %146 = dma.done [#allocation4], 64
    $region29: #{tpu_custom_call.1} parent=1 // pred_fallthru
      _
    %147 = vsyncpa [#allocation3], 1
    %148 = vsyncpa [#allocation6], 1
    %149 = vsyncpa [#allocation4], 1

</llo_original>
